<compile_context>
chip_gen: v7x
topology: tpu7x:2x2x1
jax: 0.10.0
libtpu: 0.0.40
codegen_flags: <defaults>
</compile_context>

<pallas_src>
import functools

import jax
import jax.numpy as jnp
from jax.experimental import pallas as pl
from jax.experimental.pallas import tpu as pltpu


_VMEM_LIMIT = 48 * 1024 * 1024   # below v7x's 64 MiB physical VMEM; safe everywhere


def _round_up(x, m):
    return (x + m - 1) // m * m


# ---------------------------------------------------------------------------
# Kernel A: LayerNorm1 + fused QKV projection (once per row).
# ---------------------------------------------------------------------------
def ln1_qkv_kernel(x_ref,                  # (1, TR, D)   f32
                   n1w_ref, n1b_ref,       # (1, D)       f32
                   qkvw_ref,               # (D, 3D)      bf16 (scale folded into Q cols)
                   qkv_ref,                # (1, TR, 3D)  bf16 out
                   *, eps):
    f32, bf16 = jnp.float32, jnp.bfloat16
    x = x_ref[0]                                               # (TR, D)
    mu = jnp.mean(x, axis=-1, keepdims=True)
    var = jnp.mean(jnp.square(x - mu), axis=-1, keepdims=True)
    xn = ((x - mu) * jax.lax.rsqrt(var + eps) * n1w_ref[0] + n1b_ref[0]).astype(bf16)
    # Single lane-dense (TR, D) @ (D, 3D) MXU matmul with f32 accumulation.
    qkv = jnp.dot(xn, qkvw_ref[...], preferred_element_type=f32)
    qkv_ref[0] = qkv.astype(qkv_ref.dtype)


# ---------------------------------------------------------------------------
# Kernel B: attention + output projection + residual + LayerNorm2 + MLP.
# ---------------------------------------------------------------------------
def attn_mlp_kernel(x_ref,                 # (1, TQ, D)      f32  (residual rows)
                    q_ref,                 # (1, H, TQ, hd)  bf16 (scale pre-folded)
                    k_ref, v_ref,          # (1, H, Np, hd)  bf16
                    projw_ref,             # (H, hd, D)      bf16
                    projb_ref,             # (1, D)          f32
                    n2w_ref, n2b_ref,      # (1, D)          f32
                    fc1w_ref,              # (D, Hm)         bf16
                    fc1b_ref,              # (1, Hm)         f32
                    fc2w_ref,              # (Hm, D)         bf16
                    fc2b_ref,              # (1, D)          f32
                    o_ref,                 # (1, TQ, D)      out
                    *, num_heads, eps, n_valid):
    f32, bf16 = jnp.float32, jnp.bfloat16
    x = x_ref[0]                                               # (TQ, D) f32
    TQ, D = x.shape
    Np = k_ref.shape[2]
    H = num_heads

    # Static key mask for padded sequence positions (only built if padded).
    if Np != n_valid:
        key_mask = jax.lax.broadcasted_iota(jnp.int32, (TQ, Np), 1) < n_valid
    else:
        key_mask = None

    def layernorm(z, w, b):
        mu = jnp.mean(z, axis=-1, keepdims=True)
        var = jnp.mean(jnp.square(z - mu), axis=-1, keepdims=True)
        return (z - mu) * jax.lax.rsqrt(var + eps) * w + b

    # ---- attention + output projection, accumulated head-by-head ----------
    # One (TQ, D) f32 accumulator; each head contracts against its (hd, D)
    # slice of proj_w (full-D lane-dense output), so no (H, TQ, D) f32
    # intermediate and no broadcast of activations across heads.
    acc = jnp.zeros((TQ, D), f32)
    for h in range(H):                     # small static head count
        qh = q_ref[0, h]                   # (TQ, hd) bf16
        kh = k_ref[0, h]                   # (Np, hd) bf16
        vh = v_ref[0, h]                   # (Np, hd) bf16
        dots = jax.lax.dot_general(qh, kh, (((1,), (1,)), ((), ())),
                                   preferred_element_type=f32)        # (TQ, Np)
        if key_mask is not None:
            dots = jnp.where(key_mask, dots, -1e30)
        dots = dots - jnp.max(dots, axis=-1, keepdims=True)
        p = jnp.exp(dots)
        denom = jnp.sum(p, axis=-1, keepdims=True)                    # (TQ, 1)
        o_h = jnp.dot(p.astype(bf16), vh, preferred_element_type=f32)  # (TQ, hd)
        # Deferred softmax normalization: scale the small (TQ, hd) tensor
        # with an exact reciprocal (review correctness note).
        o_h = o_h * pl.reciprocal(denom, approx=False)
        acc = acc + jnp.dot(o_h.astype(bf16), projw_ref[h],
                            preferred_element_type=f32)               # (TQ, D)

    x1 = x + acc + projb_ref[0]                                       # residual add 1

    # ---- LayerNorm2 + MLP ---------------------------------------------------
    xn2 = layernorm(x1, n2w_ref[0], n2b_ref[0]).astype(bf16)
    h1 = jnp.dot(xn2, fc1w_ref[...], preferred_element_type=f32) + fc1b_ref[0]
    h1 = jax.nn.gelu(h1, approximate=False)        # exact erf GELU (nn.GELU default)
    h2 = jnp.dot(h1.astype(bf16), fc2w_ref[...], preferred_element_type=f32) + fc2b_ref[0]
    o_ref[0] = (x1 + h2).astype(o_ref.dtype)                          # residual add 2


# ---------------------------------------------------------------------------
# Wrapper.
# ---------------------------------------------------------------------------
def block_forward(x, params, *, num_heads):
    B, N, D = x.shape
    assert D % num_heads == 0
    H = num_heads
    hd = D // H
    Hm = params["fc1_w"].shape[1]
    scale = hd ** -0.5
    bf16 = jnp.bfloat16

    # --- sequence padding / row tiling: keep (8,128)-aligned dense tiles ----
    if N > 64:
        Np = _round_up(N, 128)
        TQ = 128
    else:
        Np = _round_up(N, 8)
        TQ = Np
    NR = Np // TQ
    x_p = jnp.pad(x, ((0, 0), (0, Np - N), (0, 0))) if Np != N else x

    # --- host-side weight prep (free): bf16 cast, scale folded into Q cols ---
    qkv_w = params["qkv_w"]                                    # (D, 3D), cols = (qkv, head, hd)
    qkv_w = jnp.concatenate([qkv_w[:, :D] * scale, qkv_w[:, D:]], axis=1).astype(bf16)
    proj_w = params["proj_w"].reshape(H, hd, D).astype(bf16)   # rows = (head, hd)
    fc1_w = params["fc1_w"].astype(bf16)
    fc2_w = params["fc2_w"].astype(bf16)

    def const_spec(arr):
        nd = arr.ndim
        return pl.BlockSpec(arr.shape, lambda b, r: (0,) * nd)
    # TODO(synk): single-buffer the constant-weight BlockSpecs
    # (pipeline_mode=pl.Buffered(1)) once verified on this JAX version; their
    # index maps never change, so the default double-buffering only costs VMEM.

    # ---------------- Kernel A: LayerNorm1 + fused QKV ----------------
    qkv = pl.pallas_call(
        functools.partial(ln1_qkv_kernel, eps=1e-6),
        out_shape=jax.ShapeDtypeStruct((B, Np, 3 * D), bf16),
        grid_spec=pltpu.PrefetchScalarGridSpec(
            num_scalar_prefetch=0,
            grid=(B, NR),
            in_specs=[
                pl.BlockSpec((1, TQ, D), lambda b, r: (b, r, 0)),
                const_spec(params["norm1_w"]), const_spec(params["norm1_b"]),
                const_spec(qkv_w),
            ],
            out_specs=pl.BlockSpec((1, TQ, 3 * D), lambda b, r: (b, r, 0)),
        ),
        compiler_params=pltpu.CompilerParams(
            dimension_semantics=("parallel", "parallel"),
            vmem_limit_bytes=_VMEM_LIMIT),
        cost_estimate=pl.CostEstimate(
            flops=int(2 * B * Np * D * 3 * D),
            transcendentals=0,
            bytes_accessed=int(B * Np * D * 4 + B * Np * 3 * D * 2 + 3 * D * D * 2)),
    )(x_p, params["norm1_w"], params["norm1_b"], qkv_w)

    # Head split on the host (plain XLA layout plumbing, cheap vs. matmuls):
    # (B, Np, 3, H, hd) -> three (B, H, Np, hd) bf16 arrays.
    qkv = qkv.reshape(B, Np, 3, H, hd)
    q = jnp.transpose(qkv[:, :, 0], (0, 2, 1, 3))
    k = jnp.transpose(qkv[:, :, 1], (0, 2, 1, 3))
    v = jnp.transpose(qkv[:, :, 2], (0, 2, 1, 3))

    # ---------------- Kernel B: attention + proj + residual + LN2 + MLP ----------------
    flops = int(B * Np * (4 * Np * D + 2 * D * D + 4 * D * Hm))
    transcendentals = int(B * Np * (H * Np + Hm))
    bytes_accessed = int(2 * B * Np * D * 4 + 3 * B * Np * D * 2
                         + 2 * (D * D + 2 * D * Hm))

    out = pl.pallas_call(
        functools.partial(attn_mlp_kernel, num_heads=H, eps=1e-6, n_valid=N),
        out_shape=jax.ShapeDtypeStruct((B, Np, D), x.dtype),
        grid_spec=pltpu.PrefetchScalarGridSpec(
            num_scalar_prefetch=0,
            grid=(B, NR),
            in_specs=[
                pl.BlockSpec((1, TQ, D), lambda b, r: (b, r, 0)),         # x rows (residual)
                pl.BlockSpec((1, H, TQ, hd), lambda b, r: (b, 0, r, 0)),  # Q tile
                pl.BlockSpec((1, H, Np, hd), lambda b, r: (b, 0, 0, 0)),  # K (stays resident per b)
                pl.BlockSpec((1, H, Np, hd), lambda b, r: (b, 0, 0, 0)),  # V (stays resident per b)
                const_spec(proj_w), const_spec(params["proj_b"]),
                const_spec(params["norm2_w"]), const_spec(params["norm2_b"]),
                const_spec(fc1_w), const_spec(params["fc1_b"]),
                const_spec(fc2_w), const_spec(params["fc2_b"]),
            ],
            out_specs=pl.BlockSpec((1, TQ, D), lambda b, r: (b, r, 0)),
        ),
        compiler_params=pltpu.CompilerParams(
            dimension_semantics=("parallel", "parallel"),
            vmem_limit_bytes=_VMEM_LIMIT),
        cost_estimate=pl.CostEstimate(flops=flops,
                                      transcendentals=transcendentals,
                                      bytes_accessed=bytes_accessed),
    )(x_p, q, k, v,
      proj_w, params["proj_b"],
      params["norm2_w"], params["norm2_b"],
      fc1_w, params["fc1_b"],
      fc2_w, params["fc2_b"])

    return out[:, :N, :] if Np != N else out


# ---------------------------------------------------------------------------
# Pure-JAX f32 reference mirroring the PyTorch forward (correctness check).
# ---------------------------------------------------------------------------
def block_reference(x, params, *, num_heads):
    B, N, D = x.shape
    hd = D // num_heads
    scale = hd ** -0.5

    def ln(z, w, b):
        mu = jnp.mean(z, -1, keepdims=True)
        var = jnp.mean((z - mu) ** 2, -1, keepdims=True)
        return (z - mu) * jax.lax.rsqrt(var + 1e-6) * w[0] + b[0]

    xn = ln(x, params["norm1_w"], params["norm1_b"])
    qkv = xn @ params["qkv_w"]                                  # (B,N,3D)
    qkv = qkv.reshape(B, N, 3, num_heads, hd)
    q, k, v = (qkv[:, :, i].transpose(0, 2, 1, 3) for i in range(3))  # (B,h,N,hd)
    dots = jnp.einsum("bhid,bhjd->bhij", q, k) * scale
    attn = jax.nn.softmax(dots, axis=-1)
    out = jnp.einsum("bhij,bhjd->bhid", attn, v)
    out = out.transpose(0, 2, 1, 3).reshape(B, N, D)
    out = out @ params["proj_w"] + params["proj_b"][0]
    x = x + out
    xn2 = ln(x, params["norm2_w"], params["norm2_b"])
    h1 = jax.nn.gelu(xn2 @ params["fc1_w"] + params["fc1_b"][0], approximate=False)
    h2 = h1 @ params["fc2_w"] + params["fc2_b"][0]
    return x + h2


def init_params(key, dim, num_heads, mlp_ratio=4.0):
    hidden = int(dim * mlp_ratio)
    ks = jax.random.split(key, 6)
    s = 0.05
    return {
        "norm1_w": jnp.ones((1, dim), jnp.float32),
        "norm1_b": jnp.zeros((1, dim), jnp.float32),
        "qkv_w": s * jax.random.normal(ks[0], (dim, 3 * dim), jnp.float32),
        "proj_w": s * jax.random.normal(ks[1], (dim, dim), jnp.float32),
        "proj_b": s * jax.random.normal(ks[2], (1, dim), jnp.float32),
        "norm2_w": jnp.ones((1, dim), jnp.float32),
        "norm2_b": jnp.zeros((1, dim), jnp.float32),
        "fc1_w": s * jax.random.normal(ks[3], (dim, hidden), jnp.float32),
        "fc1_b": s * jax.random.normal(ks[4], (1, hidden), jnp.float32),
        "fc2_w": s * jax.random.normal(ks[5], (hidden, dim), jnp.float32),
        "fc2_b": jnp.zeros((1, dim), jnp.float32),
    }


if __name__ == "__main__":
    key = jax.random.PRNGKey(0)
    configs = [
        (2, 8, 32, 4),     # tiny baseline
        (2, 12, 32, 4),    # exercises N-padding + key masking
        (1, 256, 128, 2),  # exercises TQ=128 tiling (2 query tiles) and hd=64
    ]
    for (B, N, D, HEADS) in configs:
        kx, kp, key = jax.random.split(key, 3)
        x = jax.random.normal(kx, (B, N, D), jnp.float32)
        params = init_params(kp, D, HEADS)

        out = jax.block_until_ready(block_forward(x, params, num_heads=HEADS))
        ref = block_reference(x, params, num_heads=HEADS)

        assert out.shape == (B, N, D)
        max_err = float(jnp.max(jnp.abs(out - ref)))
        # bf16 matmul inputs -> loosened tolerance vs. the f32 reference.
        assert jnp.allclose(out, ref, atol=2e-2, rtol=2e-2), (B, N, D, HEADS, max_err)

    print("KERNEL_OK")
</pallas_src>

<mosaic_0001>
module attributes {stable_mosaic.version = 11 : i64} {
  func.func @ln1_qkv_kernel(%arg0: i32, %arg1: i32, %arg2: memref<1x8x32xf32, #tpu.memory_space<vmem>>, %arg3: memref<1x32xf32, #tpu.memory_space<vmem>>, %arg4: memref<1x32xf32, #tpu.memory_space<vmem>>, %arg5: memref<32x96xbf16, #tpu.memory_space<vmem>>, %arg6: memref<1x8x96xbf16, #tpu.memory_space<vmem>>) attributes {dimension_semantics = [#tpu.dimension_semantics<parallel>, #tpu.dimension_semantics<parallel>], iteration_bounds = array<i64: 2, 1>, scalar_prefetch = 0 : i64, scratch_operands = 0 : i64, tpu.core_type = #tpu.core_type<tc>, window_params = [{transform_indices = @transform_0, window_bounds = array<i64: 1, 8, 32>}, {pipeline_mode = #tpu.pipeline_mode<synchronous>, transform_indices = @transform_1, window_bounds = array<i64: 1, 32>}, {pipeline_mode = #tpu.pipeline_mode<synchronous>, transform_indices = @transform_2, window_bounds = array<i64: 1, 32>}, {pipeline_mode = #tpu.pipeline_mode<synchronous>, transform_indices = @transform_3, window_bounds = array<i64: 32, 96>}, {transform_indices = @transform_4, window_bounds = array<i64: 1, 8, 96>}]} {
    %c0 = arith.constant 0 : index
    %c0_0 = arith.constant 0 : index
    %c0_1 = arith.constant 0 : index
    %0 = vector.load %arg2[%c0, %c0_0, %c0_1] : memref<1x8x32xf32, #tpu.memory_space<vmem>>, vector<1x8x32xf32>
    %1 = vector.shape_cast %0 : vector<1x8x32xf32> to vector<8x32xf32>
    %cst = arith.constant dense<0.000000e+00> : vector<8xf32>
    %2 = vector.multi_reduction <add>, %1, %cst [1] : vector<8x32xf32> to vector<8xf32>
    %3 = vector.shape_cast %2 : vector<8xf32> to vector<8x1xf32>
    %cst_2 = arith.constant 3.200000e+01 : f32
    %4 = vector.broadcast %cst_2 : f32 to vector<8x1xf32>
    %5 = arith.divf %3, %4 : vector<8x1xf32>
    %6 = vector.broadcast %5 : vector<8x1xf32> to vector<8x32xf32>
    %7 = arith.subf %1, %6 : vector<8x32xf32>
    %8 = arith.mulf %7, %7 : vector<8x32xf32>
    %cst_3 = arith.constant dense<0.000000e+00> : vector<8xf32>
    %9 = vector.multi_reduction <add>, %8, %cst_3 [1] : vector<8x32xf32> to vector<8xf32>
    %10 = vector.shape_cast %9 : vector<8xf32> to vector<8x1xf32>
    %cst_4 = arith.constant 3.200000e+01 : f32
    %11 = vector.broadcast %cst_4 : f32 to vector<8x1xf32>
    %12 = arith.divf %10, %11 : vector<8x1xf32>
    %13 = vector.broadcast %5 : vector<8x1xf32> to vector<8x32xf32>
    %14 = arith.subf %1, %13 : vector<8x32xf32>
    %cst_5 = arith.constant 9.99999997E-7 : f32
    %15 = vector.broadcast %cst_5 : f32 to vector<8x1xf32>
    %16 = arith.addf %12, %15 : vector<8x1xf32>
    %17 = math.rsqrt %16 : vector<8x1xf32>
    %18 = vector.broadcast %17 : vector<8x1xf32> to vector<8x32xf32>
    %19 = arith.mulf %14, %18 : vector<8x32xf32>
    %c0_6 = arith.constant 0 : index
    %c0_7 = arith.constant 0 : index
    %20 = vector.load %arg3[%c0_6, %c0_7] : memref<1x32xf32, #tpu.memory_space<vmem>>, vector<1x32xf32>
    %21 = vector.shape_cast %20 : vector<1x32xf32> to vector<32xf32>
    %22 = vector.shape_cast %21 : vector<32xf32> to vector<1x32xf32>
    %23 = vector.broadcast %22 : vector<1x32xf32> to vector<8x32xf32>
    %24 = arith.mulf %19, %23 : vector<8x32xf32>
    %c0_8 = arith.constant 0 : index
    %c0_9 = arith.constant 0 : index
    %25 = vector.load %arg4[%c0_8, %c0_9] : memref<1x32xf32, #tpu.memory_space<vmem>>, vector<1x32xf32>
    %26 = vector.shape_cast %25 : vector<1x32xf32> to vector<32xf32>
    %27 = vector.shape_cast %26 : vector<32xf32> to vector<1x32xf32>
    %28 = vector.broadcast %27 : vector<1x32xf32> to vector<8x32xf32>
    %29 = arith.addf %24, %28 : vector<8x32xf32>
    %30 = arith.truncf %29 : vector<8x32xf32> to vector<8x32xbf16>
    %c0_10 = arith.constant 0 : index
    %c0_11 = arith.constant 0 : index
    %31 = vector.load %arg5[%c0_10, %c0_11] : memref<32x96xbf16, #tpu.memory_space<vmem>>, vector<32x96xbf16>
    %cst_12 = arith.constant dense<0.000000e+00> : vector<8x96xf32>
    %32 = tpu.matmul %30, %31, %cst_12 {dimension_numbers = #tpu.dot_dimension_numbers<[1], [0], [0], [1], [0, 0, 1, 1], [], []>} : vector<8x32xbf16>, vector<32x96xbf16>, vector<8x96xf32> -> vector<8x96xf32>
    %33 = arith.truncf %32 : vector<8x96xf32> to vector<8x96xbf16>
    %c0_13 = arith.constant 0 : index
    %c0_14 = arith.constant 0 : index
    %c0_15 = arith.constant 0 : index
    %34 = vector.load %arg6[%c0_13, %c0_14, %c0_15] : memref<1x8x96xbf16, #tpu.memory_space<vmem>>, vector<1x8x96xbf16>
    %35 = vector.shape_cast %34 : vector<1x8x96xbf16> to vector<8x96xbf16>
    %36 = vector.shape_cast %33 : vector<8x96xbf16> to vector<1x8x96xbf16>
    tpu.vector_store %arg6[%c0_13, %c0_14, %c0_15], %36 {strides = array<i32>} : memref<1x8x96xbf16, #tpu.memory_space<vmem>>, vector<1x8x96xbf16>,
    return
  }
  func.func @transform_0(%arg0: i32, %arg1: i32) -> (i32, i32, i32) {
    %c0_i32 = arith.constant 0 : i32
    %c0_i32_0 = arith.constant 0 : i32
    return %arg0, %arg1, %c0_i32 : i32, i32, i32
  }
  func.func @transform_1(%arg0: i32, %arg1: i32) -> (i32, i32) {
    %c0_i32 = arith.constant 0 : i32
    %c0_i32_0 = arith.constant 0 : i32
    %c0_i32_1 = arith.constant 0 : i32
    return %c0_i32, %c0_i32_0 : i32, i32
  }
  func.func @transform_2(%arg0: i32, %arg1: i32) -> (i32, i32) {
    %c0_i32 = arith.constant 0 : i32
    %c0_i32_0 = arith.constant 0 : i32
    %c0_i32_1 = arith.constant 0 : i32
    return %c0_i32, %c0_i32_0 : i32, i32
  }
  func.func @transform_3(%arg0: i32, %arg1: i32) -> (i32, i32) {
    %c0_i32 = arith.constant 0 : i32
    %c0_i32_0 = arith.constant 0 : i32
    %c0_i32_1 = arith.constant 0 : i32
    return %c0_i32, %c0_i32_0 : i32, i32
  }
  func.func @transform_4(%arg0: i32, %arg1: i32) -> (i32, i32, i32) {
    %c0_i32 = arith.constant 0 : i32
    %c0_i32_0 = arith.constant 0 : i32
    return %arg0, %arg1, %c0_i32 : i32, i32, i32
  }
}

</mosaic_0001>

<llo_original>
// kernel: tpu_custom_call.1
$region0: #{tpu_custom_call.1}
  #allocation0 [shape = 'u32[]', space=smem, size = 0x4, offset = 0x4, fixed_abs, tag = 'smem constant byte address 0x4 - core index']
  #allocation1 [shape = 'u32[144,128]{1,0:T(1,128)}', space=vmem, size = 0x12000, scoped, tag = 'internal scratch']
  %s0 = inlined_call_operand.hbm [shape: f32[2,8,32], index: 0, kind: input, shape index: {}]
  %s1 = inlined_call_operand.vmem [shape: f32[1,32], index: 1, kind: input, shape index: {}]
  %s2 = inlined_call_operand.vmem [shape: f32[1,32], index: 2, kind: input, shape index: {}]
  %s3 = inlined_call_operand.hbm [shape: bf16[32,96], index: 3, kind: input, shape index: {}]
  %s4 = inlined_call_operand.hbm [shape: bf16[2,8,96], index: 4, kind: output, shape index: {}]
  %s5 = sld [smem:[#allocation0]]
  $region57: #{tpu_custom_call.1} parent=0
    _
  %s7 = ssub.s32 1, %s5
  %s8 = scalar_select 0, %s7, %s5
  $region1: #{tpu_custom_call.1} parent=0
    #allocation2 [shape = 'u8[8192]{0}', space=vmem, size = 0x2000, scoped, tag = 'input window, operand 0']
    #allocation3 [shape = 's32[2]{0}', space=sflag, size = 0x8, scoped, tag = 'scoped memory for tpu_custom_call.1']
    #allocation4 [shape = 's32[2]{0}', space=sflag, size = 0x8, scoped, tag = 'scoped memory for tpu_custom_call.1']
    #allocation5 [shape = 'u8[8192]{0}', space=vmem, size = 0x2000, scoped, tag = 'input window, operand 3, single buffered']
    #allocation6 [shape = 's32[1]{0}', space=sflag, size = 0x4, scoped, tag = 'scoped memory for tpu_custom_call.1']
    #allocation7 [shape = 'u8[4096]{0}', space=vmem, size = 0x1000, scoped, tag = 'output window, operand 0']
    %9 = vsyncpa [#allocation3], 0
    %s10 = scalar_lea.sflag [#allocation3], 1
    %11 = vsyncpa %s10, 0
    %12 = vsyncpa [#allocation6], 0
    %13 = vsyncpa [#allocation4], 0
    %s14 = scalar_lea.sflag [#allocation4], 1
    %15 = vsyncpa %s14, 0
    loop: start=0, step=1, limit=4
    $region2: #{tpu_custom_call.1} parent=1 // loop_pre_header
      _
    $region3: #{tpu_custom_call.1} parent=1 // loop_header
      %s17 = sphi 0, %s21
      %p18 = scmp.ge.s32.totalorder %s17, 4
      %s24 = sphi 0, %s36
      %s25 = sphi 0, %s32
      %s26 = sphi 0, %s24
      %s27 = sphi 0, %s25
      %s28 = sphi 0, %s26
      %s29 = sphi 0, %s27
      %s41 = sphi 0, %s43
      %s44 = sphi 0, %s41
      %s45 = sphi 0, %s44
      %s61 = sphi 0, %s45
      %s65 = sphi 0, %s65
      %s67 = sphi 0, %s65
      %s68 = sphi 0, %s67
      %s82 = sphi 0, %s68
      %s86 = sphi 0, %s86
      %s88 = sphi 0, %s86
      %s89 = sphi 0, %s88
      %s103 = sphi 0, %s89
      %s107 = sphi 0, %s107
      %s109 = sphi 0, %s107
      %s110 = sphi 0, %s109
      %s124 = sphi 0, %s110
      %s132 = sphi 0, %s134
      %s135 = sphi 0, %s132
      %s136 = sphi 0, %s135
      %s152 = sphi 0, %s136
    $region4: #{tpu_custom_call.1} parent=1 // loop_header_branch
      %20 = sbr.rel (%p18) target = $region8
    $region5: #{tpu_custom_call.1} parent=1 // loop_body
      %s22 = ssub.s32 %s17, 1
      %s23 = ssub.s32 %s17, 2
      %s30 = sadd.s32 1, %s25
      %p31 = scmp.ge.s32.totalorder %s30, 1
      %s32 = scalar_select %p31, 0, %s30
      %s33 = sadd.s32 1, %s24
      %s34 = scalar_select %p31, %s33, %s24
      %p35 = scmp.ge.s32.totalorder %s34, 2
      %s36 = scalar_select %p35, 0, %s34
      %s37 = ssub.s32 %s24, %s36
      %s38 = ssub.s32 %s25, %s32
      %s39 = sor.u32 %s37, %s38
      %p40 = scmp.eq.s32.totalorder %s39, 0
      %s42 = sadd.s32 %s41, 1
      %s43 = scalar_select %p40, %s41, %s42
      %p46 = pneg %p40
      %p47 = scmp.eq.s32.totalorder %s17, 1
      %p48 = por %p46, %p47
      %p49 = scmp.ne.s32.totalorder %s41, %s44
      %p50 = scmp.eq.s32.totalorder %s17, 0
      %p51 = por %p49, %p50
      %p52 = scmp.ne.s32.totalorder %s41, %s44
      %p53 = scmp.eq.s32.totalorder %s22, 1
      %p54 = por %p52, %p53
      %p55 = scmp.ne.s32.totalorder %s44, %s45
      %p56 = scmp.eq.s32.totalorder %s22, 0
      %p57 = por %p55, %p56
      %p58 = scmp.ne.s32.totalorder %s44, %s45
      %p59 = scmp.eq.s32.totalorder %s23, 1
      %p60 = por %p58, %p59
      %p62 = scmp.ne.s32.totalorder %s45, %s61
      %p63 = scmp.eq.s32.totalorder %s23, 0
      %p64 = por %p62, %p63
      %s66 = sadd.s32 %s65, 1
      %p69 = scmp.eq.s32.totalorder %s17, 1
      %p70 = scmp.ne.s32.totalorder %s65, %s67
      %p71 = scmp.eq.s32.totalorder %s17, 0
      %p72 = por %p70, %p71
      %p73 = scmp.ne.s32.totalorder %s65, %s67
      %p74 = scmp.eq.s32.totalorder %s22, 1
      %p75 = por %p73, %p74
      %p76 = scmp.ne.s32.totalorder %s67, %s68
      %p77 = scmp.eq.s32.totalorder %s22, 0
      %p78 = por %p76, %p77
      %p79 = scmp.ne.s32.totalorder %s67, %s68
      %p80 = scmp.eq.s32.totalorder %s23, 1
      %p81 = por %p79, %p80
      %p83 = scmp.ne.s32.totalorder %s68, %s82
      %p84 = scmp.eq.s32.totalorder %s23, 0
      %p85 = por %p83, %p84
      %s87 = sadd.s32 %s86, 1
      %p90 = scmp.eq.s32.totalorder %s17, 1
      %p91 = scmp.ne.s32.totalorder %s86, %s88
      %p92 = scmp.eq.s32.totalorder %s17, 0
      %p93 = por %p91, %p92
      %p94 = scmp.ne.s32.totalorder %s86, %s88
      %p95 = scmp.eq.s32.totalorder %s22, 1
      %p96 = por %p94, %p95
      %p97 = scmp.ne.s32.totalorder %s88, %s89
      %p98 = scmp.eq.s32.totalorder %s22, 0
      %p99 = por %p97, %p98
      %p100 = scmp.ne.s32.totalorder %s88, %s89
      %p101 = scmp.eq.s32.totalorder %s23, 1
      %p102 = por %p100, %p101
      %p104 = scmp.ne.s32.totalorder %s89, %s103
      %p105 = scmp.eq.s32.totalorder %s23, 0
      %p106 = por %p104, %p105
      %s108 = sadd.s32 %s107, 1
      %p111 = scmp.eq.s32.totalorder %s17, 1
      %p112 = scmp.ne.s32.totalorder %s107, %s109
      %p113 = scmp.eq.s32.totalorder %s17, 0
      %p114 = por %p112, %p113
      %p115 = scmp.ne.s32.totalorder %s107, %s109
      %p116 = scmp.eq.s32.totalorder %s22, 1
      %p117 = por %p115, %p116
      %p118 = scmp.ne.s32.totalorder %s109, %s110
      %p119 = scmp.eq.s32.totalorder %s22, 0
      %p120 = por %p118, %p119
      %p121 = scmp.ne.s32.totalorder %s109, %s110
      %p122 = scmp.eq.s32.totalorder %s23, 1
      %p123 = por %p121, %p122
      %p125 = scmp.ne.s32.totalorder %s110, %s124
      %p126 = scmp.eq.s32.totalorder %s23, 0
      %p127 = por %p125, %p126
      %s128 = ssub.s32 %s24, %s36
      %s129 = ssub.s32 %s25, %s32
      %s130 = sor.u32 %s128, %s129
      %p131 = scmp.eq.s32.totalorder %s130, 0
      %s133 = sadd.s32 %s132, 1
      %s134 = scalar_select %p131, %s132, %s133
      %p137 = pneg %p131
      %p138 = scmp.eq.s32.totalorder %s17, 1
      %p139 = por %p137, %p138
      %p140 = scmp.ne.s32.totalorder %s132, %s135
      %p141 = scmp.eq.s32.totalorder %s17, 0
      %p142 = por %p140, %p141
      %p143 = scmp.ne.s32.totalorder %s132, %s135
      %p144 = scmp.eq.s32.totalorder %s22, 1
      %p145 = por %p143, %p144
      %p146 = scmp.ne.s32.totalorder %s135, %s136
      %p147 = scmp.eq.s32.totalorder %s22, 0
      %p148 = por %p146, %p147
      %p149 = scmp.ne.s32.totalorder %s135, %s136
      %p150 = scmp.eq.s32.totalorder %s23, 1
      %p151 = por %p149, %p150
      %p153 = scmp.ne.s32.totalorder %s136, %s152
      %p154 = scmp.eq.s32.totalorder %s23, 0
      %p155 = por %p153, %p154
      %p156 = scmp.le.s32.totalorder 1, %s17
      %p157 = scmp.lt.s32.totalorder %s17, 3
      %p158 = pnand %p156, %p157
      %p159 = pneg %p158
      // Predicated region
      $region9: #{tpu_custom_call.1} parent=5 // pred_check
        _
      $region10: #{tpu_custom_call.1} parent=5 // pred_check_branch
        %161 = sbr.rel (%p158) target = $region12
      $region11: #{tpu_custom_call.1} parent=5 // pred_region
        %s162 = ssub.s32 %s17, 1
        // Predicated region
        $region13: #{tpu_custom_call.1} parent=11 // pred_check
          %p163 = pneg %p78
        $region14: #{tpu_custom_call.1} parent=11 // pred_check_branch
          %165 = sbr.rel (%p163) target = $region16
        $region15: #{tpu_custom_call.1} parent=11 // pred_region
          _
        $region16: #{tpu_custom_call.1} parent=11 // pred_fallthru
          _
        // Predicated region
        $region17: #{tpu_custom_call.1} parent=11 // pred_check
          %p166 = pneg %p99
        $region18: #{tpu_custom_call.1} parent=11 // pred_check_branch
          %168 = sbr.rel (%p166) target = $region20
        $region19: #{tpu_custom_call.1} parent=11 // pred_region
          _
        $region20: #{tpu_custom_call.1} parent=11 // pred_fallthru
          _
        // Predicated region
        $region21: #{tpu_custom_call.1} parent=11 // pred_check
          %p169 = pneg %p120
        $region22: #{tpu_custom_call.1} parent=11 // pred_check_branch
          %171 = sbr.rel (%p169) target = $region24
        $region23: #{tpu_custom_call.1} parent=11 // pred_region
          %s173 = ssub.s32 256, 256
          %174 = vsyncadd [#allocation6], %s173
          %s175 = sshll.u32 [#allocation5], 4
          %s176 = int_to_ptr.vmem [resolvable:$true] %s175
          %181 = dma.hbm_to_vmem [thread:$0]  %s3, 256, %s176, [#allocation6], 64, 64, 4
        $region24: #{tpu_custom_call.1} parent=11 // pred_fallthru
          _
      $region12: #{tpu_custom_call.1} parent=5 // pred_fallthru
        _
      %p182 = scmp.lt.s32.totalorder %s17, 2
      // Predicated region
      $region25: #{tpu_custom_call.1} parent=5 // pred_check
        %p183 = pneg %p182
      $region26: #{tpu_custom_call.1} parent=5 // pred_check_branch
        %185 = sbr.rel (%p183) target = $region28
      $region27: #{tpu_custom_call.1} parent=5 // pred_region
        // Predicated region
        $region29: #{tpu_custom_call.1} parent=27 // pred_check
          %p186 = pneg %p51
        $region30: #{tpu_custom_call.1} parent=27 // pred_check_branch
          %188 = sbr.rel (%p186) target = $region32
        $region31: #{tpu_custom_call.1} parent=27 // pred_region
          %s189 = sand.u32 %s41, 1
          %s190 = scalar_lea.sflag [#allocation3], %s189
          %s191 = sand.u32 %s41, 1
          %s192 = smul.addr %s191, 8
          %s193 = scalar_lea.vmem [#allocation2], %s192
          %s195 = ssub.s32 128, 128
          %196 = vsyncadd %s190, %s195
          %s197 = sadd.s32 %s25, %s24
          %s198 = smul.addr %s197, 128
          %s199 = scalar_lea.hbm %s0, %s198
          %s201 = sshll.u32 %s193, 4
          %s202 = int_to_ptr.vmem [resolvable:$true] %s201
          %204 = dma.hbm_to_vmem [thread:$0]  %s199, 128, %s202, %s190
        $region32: #{tpu_custom_call.1} parent=27 // pred_fallthru
          _
      $region28: #{tpu_custom_call.1} parent=5 // pred_fallthru
        _
      %p205 = scmp.le.s32.totalorder 1, %s17
      %p206 = scmp.lt.s32.totalorder %s17, 3
      %p207 = pnand %p205, %p206
      %p208 = pneg %p207
      // Predicated region
      $region33: #{tpu_custom_call.1} parent=5 // pred_check
        _
      $region34: #{tpu_custom_call.1} parent=5 // pred_check_branch
        %210 = sbr.rel (%p207) target = $region36
      $region35: #{tpu_custom_call.1} parent=5 // pred_region
        %s211 = ssub.s32 %s17, 1
        %s212 = sand.u32 %s44, 1
        %s213 = scalar_lea.sflag [#allocation3], %s212
        %s214 = sand.u32 %s44, 1
        %s215 = smul.addr %s214, 8
        %s216 = scalar_lea.vmem [#allocation2], %s215
        // Predicated region
        $region37: #{tpu_custom_call.1} parent=35 // pred_check
          %p217 = pneg %p57
        $region38: #{tpu_custom_call.1} parent=35 // pred_check_branch
          %219 = sbr.rel (%p217) target = $region40
        $region39: #{tpu_custom_call.1} parent=35 // pred_region
          %220 = dma.done %s213, 128
        $region40: #{tpu_custom_call.1} parent=35 // pred_fallthru
          _
        // Predicated region
        $region41: #{tpu_custom_call.1} parent=35 // pred_check
          %p221 = pneg %p120
        $region42: #{tpu_custom_call.1} parent=35 // pred_check_branch
          %223 = sbr.rel (%p221) target = $region44
        $region43: #{tpu_custom_call.1} parent=35 // pred_region
          %224 = dma.done [#allocation6], 256
        $region44: #{tpu_custom_call.1} parent=35 // pred_fallthru
          _
        %s225 = sand.u32 %s44, 1
        %s226 = scalar_lea.sflag [#allocation3], %s225
        %s227 = sand.u32 %s44, 1
        %s228 = smul.addr %s227, 8
        %s229 = scalar_lea.vmem [#allocation2], %s228
        %p230 = pneg %p57
        %p231 = pneg %p54
        %p232 = pneg %p78
        %p233 = pneg %p75
        %p234 = pneg %p99
        %p235 = pneg %p96
        %p236 = pneg %p120
        %p237 = pneg %p117
        %p238 = pneg %p148
        %p239 = pneg %p145
        %s240 = sand.u32 %s135, 1
        %s241 = scalar_lea.sflag [#allocation4], %s240
        %s242 = sand.u32 %s135, 1
        %s243 = smul.addr %s242, 4
        %s244 = scalar_lea.vmem [#allocation7], %s243
        %v246 = vld [vmem:[%s216] sm:$0xff]
        %vm247 = vcmask 261120
        %v248 = vsel %vm247, %v246, 0.0
        %249 = vadd.xlane.f32.xlu0 %v248
        %v250 = vpop.xlane.xlu0 %249
        %v251 = vrcp.pop 32.0
        %v252 = vmul.f32 %v250, %v251
        %v253 = vsub.f32 %v246, %v252
        %v254 = vmul.f32 %v253, %v253
        %v255 = vsel %vm247, %v254, 0.0
        %256 = vadd.xlane.f32.xlu0 %v255
        %v257 = vpop.xlane.xlu0 %256
        %v258 = vmul.f32 %v257, %v251
        %v259 = vadd.f32 %v258, 1e-06
        %v260 = vrsqrt.pop %v259
        %v261 = vmul.f32 %v253, %v260
        %v262 = vld [vmem:[%s1] sm:$0x1]
        %v264 = vlaneseq
        %v265 = vshrl.u32 %v264, 7
        %v266 = vsub.s32 0, %v265
        %v267 = vrot.slane %v262, %v266
        %v269 = vmul.f32 %v261, %v267
        %v270 = vld [vmem:[%s2] sm:$0x1]
        %v272 = vlaneseq
        %v273 = vshrl.u32 %v272, 7
        %v274 = vsub.s32 0, %v273
        %v275 = vrot.slane %v270, %v274
        %v277 = vadd.f32 %v269, %v275
        %v278 = vpack.c.bf16 %v277, %v277
        %v279 = vld [vmem:[#allocation5] sm:$0xf]
        %v280 = vld [vmem:[#allocation5 + $0x4] sm:$0xf]
        %v281 = vld [vmem:[#allocation5 + $0x8] sm:$0xf]
        %v282 = vld [vmem:[#allocation5 + $0xc] sm:$0xf]
        %v287 = vunpack.c.l.b16 %v279
        %v288 = vunpack.c.l.b16 %v280
        %v289 = vunpack.c.l.b16 %v281
        %v290 = vunpack.c.l.b16 %v282
        %v291 = vpack.c.b16 %v288, %v287
        %v292 = vpack.c.b16 %v290, %v289
        %v296 = vsel %vm247, %v278, 0
        %298 = vmatprep.subr.bf16.mxu0 0
        %299 = vmatpush1.bf16.msra.mxu0 %v291
        %300 = vmatprep.subr.bf16.mxu0 0
        %301 = vmatpush1.bf16.msra.mxu0 %v292
        %302 = vmatprep.subr.bf16.mxu0 0
        %303 = vmatpush1.bf16.msra.mxu0 0
        %304 = vmatprep.subr.bf16.mxu0 0
        %305 = vmatpush1.bf16.msra.mxu0 0
        %306 = vmatprep.subr.bf16.mxu0 0
        %307 = vmatpush1.bf16.msra.mxu0 0
        %308 = vmatprep.subr.bf16.mxu0 0
        %309 = vmatpush1.bf16.msra.mxu0 0
        %310 = vmatprep.subr.bf16.mxu0 0
        %311 = vmatpush1.bf16.msra.mxu0 0
        %312 = vmatprep.subr.bf16.mxu0 0
        %313 = vmatpush1.bf16.msra.mxu0 0
        %314 = vmatprep.subr.bf16.mxu0 0
        %315 = vmatpush1.bf16.msra.mxu0 0
        %316 = vmatprep.subr.bf16.mxu0 0
        %317 = vmatpush1.bf16.msra.mxu0 0
        %318 = vmatprep.subr.bf16.mxu0 0
        %319 = vmatpush1.bf16.msra.mxu0 0
        %320 = vmatprep.subr.bf16.mxu0 0
        %321 = vmatpush1.bf16.msra.mxu0 0
        %322 = vmatprep.subr.bf16.mxu0 0
        %323 = vmatpush1.bf16.msra.mxu0 0
        %324 = vmatprep.subr.bf16.mxu0 0
        %325 = vmatpush1.bf16.msra.mxu0 0
        %326 = vmatprep.subr.bf16.mxu0 0
        %327 = vmatpush1.bf16.msra.mxu0 0
        %328 = vmatprep.subr.bf16.mxu0 0
        %329 = vmatpush1.bf16.msra.mxu0 0
        %330 = vmatprep.mubr.bf16.mxu0 0
        %331 = vmatmul.mubr.bf16.gmra.mrb[0].mxu0 %v296
        %v332 = vpop.f32.mrb[0].mxu0
        %v333 = vadd.f32 0.0, %v332
        %v334 = vpop.f32.mrb[0].mxu0
        %v335 = vpop.f32.mrb[0].mxu0
        %v336 = vpop.f32.mrb[0].mxu0
        %337 = vdwg.mxu0
        %v338 = vpack.c.bf16 %v333, %v333
        %vm339 = vcmask 781312
        %340 = vst.msk [vmem:[%s244] sm:$0xf] %vm339, %v338
        %s341 = sand.u32 %s135, 1
        %s342 = scalar_lea.sflag [#allocation4], %s341
        %s343 = sand.u32 %s135, 1
        %s344 = smul.addr %s343, 4
        %s345 = scalar_lea.vmem [#allocation7], %s344
        // Predicated region
        $region45: #{tpu_custom_call.1} parent=35 // pred_check
          %p346 = pneg %p145
        $region46: #{tpu_custom_call.1} parent=35 // pred_check_branch
          %348 = sbr.rel (%p346) target = $region48
        $region47: #{tpu_custom_call.1} parent=35 // pred_region
          %s350 = ssub.s32 64, 64
          %351 = vsyncadd %s342, %s350
          %s352 = sadd.s32 %s27, %s26
          %s353 = smul.addr %s352, 64
          %s354 = scalar_lea.hbm %s4, %s353
          %s356 = sshll.u32 %s345, 4
          %s357 = int_to_ptr.vmem [resolvable:$true] %s356
          %359 = dma.vmem_to_hbm [thread:$0]  %s357, 64, %s354, %s342
        $region48: #{tpu_custom_call.1} parent=35 // pred_fallthru
          _
      $region36: #{tpu_custom_call.1} parent=5 // pred_fallthru
        _
      %p360 = scmp.le.s32.totalorder 2, %s17
      // Predicated region
      $region49: #{tpu_custom_call.1} parent=5 // pred_check
        %p361 = pneg %p360
      $region50: #{tpu_custom_call.1} parent=5 // pred_check_branch
        %363 = sbr.rel (%p361) target = $region52
      $region51: #{tpu_custom_call.1} parent=5 // pred_region
        %s364 = ssub.s32 %s17, 2
        // Predicated region
        $region53: #{tpu_custom_call.1} parent=51 // pred_check
          %p365 = pneg %p151
        $region54: #{tpu_custom_call.1} parent=51 // pred_check_branch
          %367 = sbr.rel (%p365) target = $region56
        $region55: #{tpu_custom_call.1} parent=51 // pred_region
          %s368 = sand.u32 %s136, 1
          %s369 = scalar_lea.sflag [#allocation4], %s368
          %s370 = sand.u32 %s136, 1
          %s371 = smul.addr %s370, 4
          %s372 = scalar_lea.vmem [#allocation7], %s371
          %373 = dma.done %s369, 64
        $region56: #{tpu_custom_call.1} parent=51 // pred_fallthru
          _
      $region52: #{tpu_custom_call.1} parent=5 // pred_fallthru
        _
    $region6: #{tpu_custom_call.1} parent=1 // loop_footer
      %s21 = sadd.s32 1, %s17
    $region7: #{tpu_custom_call.1} parent=1 // loop_footer_branch
      %16 = sbr.rel target = $region3
    $region8: #{tpu_custom_call.1} parent=1 // loop_exit
      _
    %374 = vsyncpa [#allocation3], 1
    %s375 = scalar_lea.sflag [#allocation3], 1
    %376 = vsyncpa %s375, 1
    %377 = vsyncpa [#allocation6], 1
    %378 = vsyncpa [#allocation4], 1
    %s379 = scalar_lea.sflag [#allocation4], 1
    %380 = vsyncpa %s379, 1

</llo_original>
